<compile_context>
chip_gen: v6e
topology: v6e:2x2x1
jax: 0.10.0
libtpu: 0.0.40
codegen_flags: <defaults>
</compile_context>

<pallas_src>
import functools

import numpy as np
import jax
import jax.numpy as jnp
from jax.experimental import pallas as pl
from jax.experimental.pallas import tpu as pltpu


def _round_up(x, m):
    return (x + m - 1) // m * m


def _lane_group_sum(v, group, size):
    """Butterfly reduction over the lane axis (lane index l = w*group + c).

    Returns an array of the same shape where every lane holds
    sum_w v[..., w*group + c], i.e. the per-channel sum already broadcast back
    onto the (w*Cout + c) lane layout.  Requires size/group to be a power of 2.
    Uses pltpu.roll (XLU) so the MXU/VPU stay free.
    """
    shift = group
    while shift < size:
        v = v + pltpu.roll(v, shift=shift, axis=v.ndim - 1)
        shift *= 2
    return v


def _deconv_block_kernel(x_ref, w_ref, o_ref, xs_ref, *,
                         NB, H, K, pad, Hseg, Cout, eps, inv_hw, activation):
    """One group of NB batch elements per grid step.

    x_ref : (NB, H, W*Cin)      unpadded inputs, channels folded into lanes
    w_ref : (K, W*Cin, W*Cout)  banded conv weights (kw taps + W zero-pad folded)
    o_ref : (NB, H, W*Cout)     lane-dense output tile
    xs_ref: ((NB-1)*Hseg + H + 2*pad, W*Cin)  persistent padded/stacked scratch
    """
    wcout = o_ref.shape[-1]
    m_full = (NB - 1) * Hseg + H

    # ---- zero the scratch ONCE: pad/junk rows stay zero across all steps, ----
    # ---- data rows are fully overwritten every step.                      ----
    @pl.when(pl.program_id(0) == 0)
    def _():
        xs_ref[...] = jnp.zeros(xs_ref.shape, xs_ref.dtype)

    # ---- stack NB batches along sublanes (batch b data at rows b*Hseg+pad) ----
    for b in range(NB):                              # static unroll, NB small
        xs_ref[pl.ds(b * Hseg + pad, H), :] = x_ref[b, :, :].astype(xs_ref.dtype)

    # ---- convolution: K row-shifted matmuls against the banded weight,    ----
    # ---- all NB batches in a single (m_full, W*Cin)x(W*Cin, W*Cout) call  ----
    # ---- per tap.  Rows between batch segments are junk, discarded below. ----
    acc = jnp.zeros((m_full, wcout), jnp.float32)
    for kh in range(K):                              # static unroll, K small
        lhs = xs_ref[pl.ds(kh, m_full), :]
        acc = acc + jnp.dot(lhs, w_ref[kh], preferred_element_type=jnp.float32)
    # NOTE: the ConvTranspose2d bias is intentionally dropped -- it cancels
    # exactly under InstanceNorm2d(affine=False).

    # ---- InstanceNorm2d + activation, per stacked batch element.          ----
    # ---- Single pass: var = E[x^2] - mean^2; lane reduction over the W    ----
    # ---- groups is a log2(W)-step roll butterfly (no projector matmul).   ----
    for b in range(NB):
        y = acc[b * Hseg:b * Hseg + H, :]            # sublane-aligned slice
        s1 = _lane_group_sum(jnp.sum(y, axis=0, keepdims=True), Cout, wcout)
        s2 = _lane_group_sum(jnp.sum(y * y, axis=0, keepdims=True), Cout, wcout)
        mean = s1 * inv_hw
        var = s2 * inv_hw - mean * mean
        out = (y - mean) * jax.lax.rsqrt(var + eps)
        if activation == "relu":
            out = jnp.maximum(out, 0.0)
        elif activation == "leaky":
            out = jnp.where(out >= 0.0, out, 0.2 * out)
        o_ref[b, :, :] = out.astype(o_ref.dtype)


def deconv_block(x_nchw, weight_pt, bias=None, *, kernel_size, stride=1,
                 norm="instance", activation="relu", eps=1e-5, batch_block=8):
    """Forward pass of DeconvBlock.

    x_nchw   : (N, Cin, H, W) float32
    weight_pt: (Cin, Cout, K, K)  -- PyTorch ConvTranspose2d weight layout
    bias     : (Cout,) -- accepted for API parity but unused: it cancels exactly
               under InstanceNorm2d(affine=False).
    Returns (N, Cout, H, W) float32 (stride=1, output_padding=0 => same size).
    """
    del bias  # exactly cancelled by the per-channel mean subtraction
    assert stride == 1, "stride > 1 transposed conv is not implemented"
    assert norm == "instance", "only norm='instance' is implemented"
    K = int(kernel_size)
    assert K % 2 == 1, "even kernel_size (asymmetric output size) not implemented"

    N, Cin, H, W = x_nchw.shape
    Cout = weight_pt.shape[1]
    assert W & (W - 1) == 0, "lane roll butterfly needs W to be a power of two"
    # NOTE: module uses ConvTranspose2d padding=(K-1)//2 => equivalent regular
    # conv padding is also (K-1)//2 for odd K.
    pad = (K - 1) // 2
    WCin, WCout = W * Cin, W * Cout

    # batch stacking: largest divisor of N that is <= batch_block (M >= ~128
    # for H=16 when NB=8; v6e/v7x could go higher).
    NB = 1
    for d in range(1, min(N, batch_block) + 1):
        if N % d == 0:
            NB = d
    G = N // NB
    Hseg = _round_up(H + 2 * pad, 8)        # 8-aligned per-batch segment height
    M_full = (NB - 1) * Hseg + H
    R = M_full + 2 * pad                    # scratch rows

    # ---- glue: lane-dense input layout (N, H, W*Cin) ----
    # TODO(synk): keep NHWC / (N,H,W*C) end-to-end in the surrounding model to
    # drop these HBM-round-trip transposes entirely.
    x_flat = jnp.transpose(x_nchw, (0, 2, 3, 1)).reshape(N, H, WCin)
    x_flat = x_flat.astype(jnp.float32)

    # ---- glue: transposed conv -> regular conv weights, banded over W ----
    # regular-conv weights: flip spatially, swap in/out channels -> (K,K,Cin,Cout)
    w_conv = jnp.transpose(weight_pt[:, :, ::-1, ::-1], (2, 3, 0, 1)).astype(jnp.float32)
    # selector folds the kw taps and the W-direction zero padding:
    #   sel[kw, wi, w] = 1  iff  wi == w + kw - pad  and  0 <= wi < W
    sel = np.zeros((K, W, W), np.float32)
    for kw in range(K):
        for w in range(W):
            wi = w + kw - pad
            if 0 <= wi < W:
                sel[kw, wi, w] = 1.0
    band = jnp.einsum("aij,hacd->hicjd", jnp.asarray(sel), w_conv)
    band = band.reshape(K, WCin, WCout)     # band[kh, wi*Cin+ci, w*Cout+co]

    kernel = functools.partial(
        _deconv_block_kernel, NB=NB, H=H, K=K, pad=pad, Hseg=Hseg, Cout=Cout,
        eps=float(eps), inv_hw=float(1.0 / (H * W)), activation=activation)

    cost = pl.CostEstimate(
        flops=2 * G * K * M_full * WCin * WCout,
        transcendentals=N * WCout,
        bytes_accessed=4 * (N * H * WCin + K * WCin * WCout + N * H * WCout),
    )

    out_flat = pl.pallas_call(
        kernel,
        out_shape=jax.ShapeDtypeStruct((N, H, WCout), jnp.float32),
        grid_spec=pltpu.PrefetchScalarGridSpec(
            num_scalar_prefetch=0,
            grid=(G,),
            in_specs=[
                pl.BlockSpec((NB, H, WCin), lambda g: (g, 0, 0)),
                # grid-invariant banded weight (could be pl.Buffered(1) at
                # production shapes to halve its VMEM footprint)
                pl.BlockSpec((K, WCin, WCout), lambda g: (0, 0, 0)),
            ],
            out_specs=pl.BlockSpec((NB, H, WCout), lambda g: (g, 0, 0)),
            scratch_shapes=[pltpu.VMEM((R, WCin), jnp.float32)],
        ),
        compiler_params=pltpu.CompilerParams(
            dimension_semantics=("parallel",),
        ),
        cost_estimate=cost,
    )(x_flat, band)

    out = out_flat.reshape(N, H, W, Cout)
    return jnp.transpose(out, (0, 3, 1, 2))      # back to NCHW


def _reference(x_nchw, weight_pt, bias, *, kernel_size, eps=1e-5, activation="relu"):
    """Pure-JAX reference (same math incl. bias, HIGHEST precision)."""
    K = kernel_size
    pad = (K - 1) // 2
    x_nhwc = jnp.transpose(x_nchw, (0, 2, 3, 1))
    w_conv = jnp.transpose(weight_pt[:, :, ::-1, ::-1], (2, 3, 0, 1))
    y = jax.lax.conv_general_dilated(
        x_nhwc, w_conv, window_strides=(1, 1),
        padding=[(pad, pad), (pad, pad)],
        dimension_numbers=("NHWC", "HWIO", "NHWC"),
        precision=jax.lax.Precision.HIGHEST,
    ) + bias
    mean = jnp.mean(y, axis=(1, 2), keepdims=True)
    var = jnp.mean((y - mean) ** 2, axis=(1, 2), keepdims=True)
    y = (y - mean) * jax.lax.rsqrt(var + eps)
    if activation == "relu":
        y = jnp.maximum(y, 0.0)
    elif activation == "leaky":
        y = jnp.where(y >= 0.0, y, 0.2 * y)
    return jnp.transpose(y, (0, 3, 1, 2))


if __name__ == "__main__":
    # DeconvBlock(in_channels=4, out_channels=8, kernel_size=3) on a 2x4x16x16 input.
    N, Cin, H, W = 2, 4, 16, 16
    Cout, K = 8, 3

    key = jax.random.PRNGKey(0)
    kx, kw, kb = jax.random.split(key, 3)
    x = jax.random.normal(kx, (N, Cin, H, W), dtype=jnp.float32)
    # PyTorch ConvTranspose2d weight shape: (in_channels, out_channels, kH, kW)
    weight = 0.1 * jax.random.normal(kw, (Cin, Cout, K, K), dtype=jnp.float32)
    bias = 0.1 * jax.random.normal(kb, (Cout,), dtype=jnp.float32)

    out = deconv_block(x, weight, bias, kernel_size=K, stride=1,
                       norm="instance", activation="relu")
    out = jax.block_until_ready(out)

    ref = _reference(x, weight, bias, kernel_size=K)
    assert out.shape == (N, Cout, H, W)
    # Tolerance accounts for default-precision MXU matmuls (bf16 operand rounding).
    assert jnp.allclose(out, ref, atol=2e-3, rtol=1e-3), "mismatch vs reference"

    print("KERNEL_OK")
</pallas_src>

<mosaic_0001>
module attributes {stable_mosaic.version = 11 : i64} {
  func.func @_deconv_block_kernel(%arg0: i32, %arg1: memref<2x16x64xf32, #tpu.memory_space<vmem>>, %arg2: memref<3x64x128xf32, #tpu.memory_space<vmem>>, %arg3: memref<2x16x128xf32, #tpu.memory_space<vmem>>, %arg4: memref<42x64xf32, #tpu.memory_space<vmem>>) attributes {dimension_semantics = [#tpu.dimension_semantics<parallel>], iteration_bounds = array<i64: 1>, scalar_prefetch = 0 : i64, scratch_operands = 1 : i64, tpu.core_type = #tpu.core_type<tc>, window_params = [{transform_indices = @transform_0, window_bounds = array<i64: 2, 16, 64>}, {pipeline_mode = #tpu.pipeline_mode<synchronous>, transform_indices = @transform_1, window_bounds = array<i64: 3, 64, 128>}, {transform_indices = @transform_2, window_bounds = array<i64: 2, 16, 128>}]} {
    %c0_i32 = arith.constant 0 : i32
    %0 = arith.cmpi eq, %arg0, %c0_i32 : i32
    %1 = arith.extui %0 : i1 to i32
    %c0_i32_0 = arith.constant 0 : i32
    %2 = arith.cmpi ne, %1, %c0_i32_0 : i32
    scf.if %2 {
      %cst_55 = arith.constant 0.000000e+00 : f32
      %105 = vector.broadcast %cst_55 : f32 to vector<42x64xf32>
      %c0_56 = arith.constant 0 : index
      %c0_57 = arith.constant 0 : index
      %106 = vector.load %arg4[%c0_56, %c0_57] : memref<42x64xf32, #tpu.memory_space<vmem>>, vector<42x64xf32>
      tpu.vector_store %arg4[%c0_56, %c0_57], %105 {strides = array<i32>} : memref<42x64xf32, #tpu.memory_space<vmem>>, vector<42x64xf32>,
    } else {
    }
    %c0 = arith.constant 0 : index
    %c0_1 = arith.constant 0 : index
    %c0_2 = arith.constant 0 : index
    %3 = vector.load %arg1[%c0, %c0_1, %c0_2] : memref<2x16x64xf32, #tpu.memory_space<vmem>>, vector<1x16x64xf32>
    %4 = vector.shape_cast %3 : vector<1x16x64xf32> to vector<16x64xf32>
    %c1 = arith.constant 1 : index
    %c0_3 = arith.constant 0 : index
    %5 = vector.load %arg4[%c1, %c0_3] : memref<42x64xf32, #tpu.memory_space<vmem>>, vector<16x64xf32>
    tpu.vector_store %arg4[%c1, %c0_3], %4 {strides = array<i32>} : memref<42x64xf32, #tpu.memory_space<vmem>>, vector<16x64xf32>,
    %c1_4 = arith.constant 1 : index
    %c0_5 = arith.constant 0 : index
    %c0_6 = arith.constant 0 : index
    %6 = vector.load %arg1[%c1_4, %c0_5, %c0_6] : memref<2x16x64xf32, #tpu.memory_space<vmem>>, vector<1x16x64xf32>
    %7 = vector.shape_cast %6 : vector<1x16x64xf32> to vector<16x64xf32>
    %c25 = arith.constant 25 : index
    %c0_7 = arith.constant 0 : index
    %8 = vector.load %arg4[%c25, %c0_7] : memref<42x64xf32, #tpu.memory_space<vmem>>, vector<16x64xf32>
    tpu.vector_store %arg4[%c25, %c0_7], %7 {strides = array<i32>} : memref<42x64xf32, #tpu.memory_space<vmem>>, vector<16x64xf32>,
    %cst = arith.constant 0.000000e+00 : f32
    %9 = vector.broadcast %cst : f32 to vector<40x128xf32>
    %c0_8 = arith.constant 0 : index
    %c0_9 = arith.constant 0 : index
    %10 = vector.load %arg4[%c0_8, %c0_9] : memref<42x64xf32, #tpu.memory_space<vmem>>, vector<40x64xf32>
    %c0_10 = arith.constant 0 : index
    %c0_11 = arith.constant 0 : index
    %c0_12 = arith.constant 0 : index
    %11 = vector.load %arg2[%c0_10, %c0_11, %c0_12] : memref<3x64x128xf32, #tpu.memory_space<vmem>>, vector<1x64x128xf32>
    %12 = vector.shape_cast %11 : vector<1x64x128xf32> to vector<64x128xf32>
    %cst_13 = arith.constant dense<0.000000e+00> : vector<40x128xf32>
    %13 = tpu.matmul %10, %12, %cst_13 {dimension_numbers = #tpu.dot_dimension_numbers<[1], [0], [0], [1], [0, 0, 1, 1], [], []>} : vector<40x64xf32>, vector<64x128xf32>, vector<40x128xf32> -> vector<40x128xf32>
    %14 = arith.addf %9, %13 : vector<40x128xf32>
    %c1_14 = arith.constant 1 : index
    %c0_15 = arith.constant 0 : index
    %15 = vector.load %arg4[%c1_14, %c0_15] : memref<42x64xf32, #tpu.memory_space<vmem>>, vector<40x64xf32>
    %c1_16 = arith.constant 1 : index
    %c0_17 = arith.constant 0 : index
    %c0_18 = arith.constant 0 : index
    %16 = vector.load %arg2[%c1_16, %c0_17, %c0_18] : memref<3x64x128xf32, #tpu.memory_space<vmem>>, vector<1x64x128xf32>
    %17 = vector.shape_cast %16 : vector<1x64x128xf32> to vector<64x128xf32>
    %cst_19 = arith.constant dense<0.000000e+00> : vector<40x128xf32>
    %18 = tpu.matmul %15, %17, %cst_19 {dimension_numbers = #tpu.dot_dimension_numbers<[1], [0], [0], [1], [0, 0, 1, 1], [], []>} : vector<40x64xf32>, vector<64x128xf32>, vector<40x128xf32> -> vector<40x128xf32>
    %19 = arith.addf %14, %18 : vector<40x128xf32>
    %c2 = arith.constant 2 : index
    %c0_20 = arith.constant 0 : index
    %20 = vector.load %arg4[%c2, %c0_20] : memref<42x64xf32, #tpu.memory_space<vmem>>, vector<40x64xf32>
    %c2_21 = arith.constant 2 : index
    %c0_22 = arith.constant 0 : index
    %c0_23 = arith.constant 0 : index
    %21 = vector.load %arg2[%c2_21, %c0_22, %c0_23] : memref<3x64x128xf32, #tpu.memory_space<vmem>>, vector<1x64x128xf32>
    %22 = vector.shape_cast %21 : vector<1x64x128xf32> to vector<64x128xf32>
    %cst_24 = arith.constant dense<0.000000e+00> : vector<40x128xf32>
    %23 = tpu.matmul %20, %22, %cst_24 {dimension_numbers = #tpu.dot_dimension_numbers<[1], [0], [0], [1], [0, 0, 1, 1], [], []>} : vector<40x64xf32>, vector<64x128xf32>, vector<40x128xf32> -> vector<40x128xf32>
    %24 = arith.addf %19, %23 : vector<40x128xf32>
    %25 = vector.extract_strided_slice %24 {offsets = [0, 0], sizes = [16, 128], strides = [1, 1]} : vector<40x128xf32> to vector<16x128xf32>
    %cst_25 = arith.constant dense<0.000000e+00> : vector<128xf32>
    %26 = vector.multi_reduction <add>, %25, %cst_25 [0] : vector<16x128xf32> to vector<128xf32>
    %27 = vector.shape_cast %26 : vector<128xf32> to vector<1x128xf32>
    %c8_i32 = arith.constant 8 : i32
    %28 = tpu.dynamic_rotate %27 by %c8_i32 dim 1 : vector<1x128xf32>, i32 -> vector<1x128xf32>
    %29 = arith.addf %27, %28 : vector<1x128xf32>
    %c16_i32 = arith.constant 16 : i32
    %30 = tpu.dynamic_rotate %29 by %c16_i32 dim 1 : vector<1x128xf32>, i32 -> vector<1x128xf32>
    %31 = arith.addf %29, %30 : vector<1x128xf32>
    %c32_i32 = arith.constant 32 : i32
    %32 = tpu.dynamic_rotate %31 by %c32_i32 dim 1 : vector<1x128xf32>, i32 -> vector<1x128xf32>
    %33 = arith.addf %31, %32 : vector<1x128xf32>
    %c64_i32 = arith.constant 64 : i32
    %34 = tpu.dynamic_rotate %33 by %c64_i32 dim 1 : vector<1x128xf32>, i32 -> vector<1x128xf32>
    %35 = arith.addf %33, %34 : vector<1x128xf32>
    %36 = arith.mulf %25, %25 : vector<16x128xf32>
    %cst_26 = arith.constant dense<0.000000e+00> : vector<128xf32>
    %37 = vector.multi_reduction <add>, %36, %cst_26 [0] : vector<16x128xf32> to vector<128xf32>
    %38 = vector.shape_cast %37 : vector<128xf32> to vector<1x128xf32>
    %c8_i32_27 = arith.constant 8 : i32
    %39 = tpu.dynamic_rotate %38 by %c8_i32_27 dim 1 : vector<1x128xf32>, i32 -> vector<1x128xf32>
    %40 = arith.addf %38, %39 : vector<1x128xf32>
    %c16_i32_28 = arith.constant 16 : i32
    %41 = tpu.dynamic_rotate %40 by %c16_i32_28 dim 1 : vector<1x128xf32>, i32 -> vector<1x128xf32>
    %42 = arith.addf %40, %41 : vector<1x128xf32>
    %c32_i32_29 = arith.constant 32 : i32
    %43 = tpu.dynamic_rotate %42 by %c32_i32_29 dim 1 : vector<1x128xf32>, i32 -> vector<1x128xf32>
    %44 = arith.addf %42, %43 : vector<1x128xf32>
    %c64_i32_30 = arith.constant 64 : i32
    %45 = tpu.dynamic_rotate %44 by %c64_i32_30 dim 1 : vector<1x128xf32>, i32 -> vector<1x128xf32>
    %46 = arith.addf %44, %45 : vector<1x128xf32>
    %cst_31 = arith.constant 3.906250e-03 : f32
    %47 = vector.broadcast %cst_31 : f32 to vector<1x128xf32>
    %48 = arith.mulf %35, %47 : vector<1x128xf32>
    %cst_32 = arith.constant 3.906250e-03 : f32
    %49 = vector.broadcast %cst_32 : f32 to vector<1x128xf32>
    %50 = arith.mulf %46, %49 : vector<1x128xf32>
    %51 = arith.mulf %48, %48 : vector<1x128xf32>
    %52 = arith.subf %50, %51 : vector<1x128xf32>
    %53 = vector.broadcast %48 : vector<1x128xf32> to vector<16x128xf32>
    %54 = arith.subf %25, %53 : vector<16x128xf32>
    %cst_33 = arith.constant 9.99999974E-6 : f32
    %55 = vector.broadcast %cst_33 : f32 to vector<1x128xf32>
    %56 = arith.addf %52, %55 : vector<1x128xf32>
    %57 = math.rsqrt %56 : vector<1x128xf32>
    %58 = vector.broadcast %57 : vector<1x128xf32> to vector<16x128xf32>
    %59 = arith.mulf %54, %58 : vector<16x128xf32>
    %cst_34 = arith.constant 0.000000e+00 : f32
    %60 = vector.broadcast %cst_34 : f32 to vector<16x128xf32>
    %61 = arith.maximumf %59, %60 : vector<16x128xf32>
    %c0_35 = arith.constant 0 : index
    %c0_36 = arith.constant 0 : index
    %c0_37 = arith.constant 0 : index
    %62 = vector.load %arg3[%c0_35, %c0_36, %c0_37] : memref<2x16x128xf32, #tpu.memory_space<vmem>>, vector<1x16x128xf32>
    %63 = vector.shape_cast %62 : vector<1x16x128xf32> to vector<16x128xf32>
    %64 = vector.shape_cast %61 : vector<16x128xf32> to vector<1x16x128xf32>
    tpu.vector_store %arg3[%c0_35, %c0_36, %c0_37], %64 {strides = array<i32>} : memref<2x16x128xf32, #tpu.memory_space<vmem>>, vector<1x16x128xf32>,
    %65 = vector.extract_strided_slice %24 {offsets = [24, 0], sizes = [16, 128], strides = [1, 1]} : vector<40x128xf32> to vector<16x128xf32>
    %cst_38 = arith.constant dense<0.000000e+00> : vector<128xf32>
    %66 = vector.multi_reduction <add>, %65, %cst_38 [0] : vector<16x128xf32> to vector<128xf32>
    %67 = vector.shape_cast %66 : vector<128xf32> to vector<1x128xf32>
    %c8_i32_39 = arith.constant 8 : i32
    %68 = tpu.dynamic_rotate %67 by %c8_i32_39 dim 1 : vector<1x128xf32>, i32 -> vector<1x128xf32>
    %69 = arith.addf %67, %68 : vector<1x128xf32>
    %c16_i32_40 = arith.constant 16 : i32
    %70 = tpu.dynamic_rotate %69 by %c16_i32_40 dim 1 : vector<1x128xf32>, i32 -> vector<1x128xf32>
    %71 = arith.addf %69, %70 : vector<1x128xf32>
    %c32_i32_41 = arith.constant 32 : i32
    %72 = tpu.dynamic_rotate %71 by %c32_i32_41 dim 1 : vector<1x128xf32>, i32 -> vector<1x128xf32>
    %73 = arith.addf %71, %72 : vector<1x128xf32>
    %c64_i32_42 = arith.constant 64 : i32
    %74 = tpu.dynamic_rotate %73 by %c64_i32_42 dim 1 : vector<1x128xf32>, i32 -> vector<1x128xf32>
    %75 = arith.addf %73, %74 : vector<1x128xf32>
    %76 = arith.mulf %65, %65 : vector<16x128xf32>
    %cst_43 = arith.constant dense<0.000000e+00> : vector<128xf32>
    %77 = vector.multi_reduction <add>, %76, %cst_43 [0] : vector<16x128xf32> to vector<128xf32>
    %78 = vector.shape_cast %77 : vector<128xf32> to vector<1x128xf32>
    %c8_i32_44 = arith.constant 8 : i32
    %79 = tpu.dynamic_rotate %78 by %c8_i32_44 dim 1 : vector<1x128xf32>, i32 -> vector<1x128xf32>
    %80 = arith.addf %78, %79 : vector<1x128xf32>
    %c16_i32_45 = arith.constant 16 : i32
    %81 = tpu.dynamic_rotate %80 by %c16_i32_45 dim 1 : vector<1x128xf32>, i32 -> vector<1x128xf32>
    %82 = arith.addf %80, %81 : vector<1x128xf32>
    %c32_i32_46 = arith.constant 32 : i32
    %83 = tpu.dynamic_rotate %82 by %c32_i32_46 dim 1 : vector<1x128xf32>, i32 -> vector<1x128xf32>
    %84 = arith.addf %82, %83 : vector<1x128xf32>
    %c64_i32_47 = arith.constant 64 : i32
    %85 = tpu.dynamic_rotate %84 by %c64_i32_47 dim 1 : vector<1x128xf32>, i32 -> vector<1x128xf32>
    %86 = arith.addf %84, %85 : vector<1x128xf32>
    %cst_48 = arith.constant 3.906250e-03 : f32
    %87 = vector.broadcast %cst_48 : f32 to vector<1x128xf32>
    %88 = arith.mulf %75, %87 : vector<1x128xf32>
    %cst_49 = arith.constant 3.906250e-03 : f32
    %89 = vector.broadcast %cst_49 : f32 to vector<1x128xf32>
    %90 = arith.mulf %86, %89 : vector<1x128xf32>
    %91 = arith.mulf %88, %88 : vector<1x128xf32>
    %92 = arith.subf %90, %91 : vector<1x128xf32>
    %93 = vector.broadcast %88 : vector<1x128xf32> to vector<16x128xf32>
    %94 = arith.subf %65, %93 : vector<16x128xf32>
    %cst_50 = arith.constant 9.99999974E-6 : f32
    %95 = vector.broadcast %cst_50 : f32 to vector<1x128xf32>
    %96 = arith.addf %92, %95 : vector<1x128xf32>
    %97 = math.rsqrt %96 : vector<1x128xf32>
    %98 = vector.broadcast %97 : vector<1x128xf32> to vector<16x128xf32>
    %99 = arith.mulf %94, %98 : vector<16x128xf32>
    %cst_51 = arith.constant 0.000000e+00 : f32
    %100 = vector.broadcast %cst_51 : f32 to vector<16x128xf32>
    %101 = arith.maximumf %99, %100 : vector<16x128xf32>
    %c1_52 = arith.constant 1 : index
    %c0_53 = arith.constant 0 : index
    %c0_54 = arith.constant 0 : index
    %102 = vector.load %arg3[%c1_52, %c0_53, %c0_54] : memref<2x16x128xf32, #tpu.memory_space<vmem>>, vector<1x16x128xf32>
    %103 = vector.shape_cast %102 : vector<1x16x128xf32> to vector<16x128xf32>
    %104 = vector.shape_cast %101 : vector<16x128xf32> to vector<1x16x128xf32>
    tpu.vector_store %arg3[%c1_52, %c0_53, %c0_54], %104 {strides = array<i32>} : memref<2x16x128xf32, #tpu.memory_space<vmem>>, vector<1x16x128xf32>,
    return
  }
  func.func @transform_0(%arg0: i32) -> (i32, i32, i32) {
    %c0_i32 = arith.constant 0 : i32
    %c0_i32_0 = arith.constant 0 : i32
    %c0_i32_1 = arith.constant 0 : i32
    return %arg0, %c0_i32, %c0_i32_0 : i32, i32, i32
  }
  func.func @transform_1(%arg0: i32) -> (i32, i32, i32) {
    %c0_i32 = arith.constant 0 : i32
    %c0_i32_0 = arith.constant 0 : i32
    %c0_i32_1 = arith.constant 0 : i32
    %c0_i32_2 = arith.constant 0 : i32
    return %c0_i32, %c0_i32_0, %c0_i32_1 : i32, i32, i32
  }
  func.func @transform_2(%arg0: i32) -> (i32, i32, i32) {
    %c0_i32 = arith.constant 0 : i32
    %c0_i32_0 = arith.constant 0 : i32
    %c0_i32_1 = arith.constant 0 : i32
    return %arg0, %c0_i32, %c0_i32_0 : i32, i32, i32
  }
}

</mosaic_0001>

<llo_original>
// kernel: tpu_custom_call.1
$region0: #{tpu_custom_call.1}
  #allocation0 [shape = 'u32[]', space=smem, size = 0x4, offset = 0x4, fixed_abs, tag = 'smem constant byte address 0x4 - core index']
  #allocation1 [shape = 'u32[144,128]{1,0:T(1,128)}', space=vmem, size = 0x12000, scoped, tag = 'internal scratch']
  #allocation2 [shape = 'f32[42,64]{1,0:T(8,128)}', space=vmem, size = 0x6000, scoped, tag = 'scratch operand']
  %s0 = inlined_call_operand.hbm [shape: f32[2,16,64], index: 0, kind: input, shape index: {}]
  %s1 = inlined_call_operand.hbm [shape: f32[3,64,128], index: 1, kind: input, shape index: {}]
  %s2 = inlined_call_operand.hbm [shape: f32[2,16,128], index: 2, kind: output, shape index: {}]
  %s3 = sld [smem:[#allocation0]]
  $region30: #{tpu_custom_call.1} parent=0
    _
  %s5 = ssub.s32 1, %s3
  %s6 = scalar_select 0, %s5, %s3
  $region1: #{tpu_custom_call.1} parent=0
    #allocation3 [shape = 'u8[16384]{0}', space=vmem, size = 0x4000, scoped, tag = 'input window, operand 0, single buffered']
    #allocation4 [shape = 's32[1]{0}', space=sflag, size = 0x4, scoped, tag = 'scoped memory for tpu_custom_call.1']
    #allocation5 [shape = 's32[1]{0}', space=sflag, size = 0x4, scoped, tag = 'scoped memory for tpu_custom_call.1']
    #allocation6 [shape = 'u8[98304]{0}', space=vmem, size = 0x18000, scoped, tag = 'input window, operand 1, single buffered']
    #allocation7 [shape = 's32[1]{0}', space=sflag, size = 0x4, scoped, tag = 'scoped memory for tpu_custom_call.1']
    #allocation8 [shape = 'u8[16384]{0}', space=vmem, size = 0x4000, scoped, tag = 'output window, operand 0, single buffered']
    %7 = vsyncpa [#allocation4], 0
    %8 = vsyncpa [#allocation7], 0
    %9 = vsyncpa [#allocation5], 0
    // Predicated region
    $region2: #{tpu_custom_call.1} parent=1 // pred_check
      _
    $region3: #{tpu_custom_call.1} parent=1 // pred_check_branch
      %11 = sbr.rel (0) target = $region5
    $region4: #{tpu_custom_call.1} parent=1 // pred_region
      %s13 = ssub.s32 512, 512
      %14 = vsyncadd [#allocation4], %s13
      %s15 = sshll.u32 [#allocation3], 4
      %s16 = int_to_ptr.vmem [resolvable:$true] %s15
      %21 = dma.hbm_to_vmem [thread:$0]  %s0, 512, %s16, [#allocation4], 128, 128, 8
    $region5: #{tpu_custom_call.1} parent=1 // pred_fallthru
      _
    // Predicated region
    $region6: #{tpu_custom_call.1} parent=1 // pred_check
      _
    $region7: #{tpu_custom_call.1} parent=1 // pred_check_branch
      %23 = sbr.rel (0) target = $region9
    $region8: #{tpu_custom_call.1} parent=1 // pred_region
      %s25 = ssub.s32 3072, 3072
      %26 = vsyncadd [#allocation7], %s25
      %s27 = sshll.u32 [#allocation6], 4
      %s28 = int_to_ptr.vmem [resolvable:$true] %s27
      %33 = dma.hbm_to_vmem [thread:$0]  %s1, 3072, %s28, [#allocation7], 128, 128, 8
    $region9: #{tpu_custom_call.1} parent=1 // pred_fallthru
      _
    // Predicated region
    $region10: #{tpu_custom_call.1} parent=1 // pred_check
      _
    $region11: #{tpu_custom_call.1} parent=1 // pred_check_branch
      %35 = sbr.rel (0) target = $region13
    $region12: #{tpu_custom_call.1} parent=1 // pred_region
      %36 = dma.done [#allocation4], 512
    $region13: #{tpu_custom_call.1} parent=1 // pred_fallthru
      _
    // Predicated region
    $region14: #{tpu_custom_call.1} parent=1 // pred_check
      _
    $region15: #{tpu_custom_call.1} parent=1 // pred_check_branch
      %38 = sbr.rel (0) target = $region17
    $region16: #{tpu_custom_call.1} parent=1 // pred_region
      %39 = dma.done [#allocation7], 3072
    $region17: #{tpu_custom_call.1} parent=1 // pred_fallthru
      _
    %p40 = scmp.eq.s32.totalorder 0, 0
    // Predicated region
    $region18: #{tpu_custom_call.1} parent=1 // pred_check
      %p41 = pneg %p40
    $region19: #{tpu_custom_call.1} parent=1 // pred_check_branch
      %43 = sbr.rel (%p41) target = $region21
    $region20: #{tpu_custom_call.1} parent=1 // pred_region
      %vm44 = vcmask 523264
      %45 = vst.msk [vmem:[#allocation2] sm:$0xff] %vm44, 0.0
      %46 = vst.msk [vmem:[#allocation2 + $0x8] sm:$0xff] %vm44, 0.0
      %47 = vst.msk [vmem:[#allocation2 + $0x10] sm:$0xff] %vm44, 0.0
      %48 = vst.msk [vmem:[#allocation2 + $0x18] sm:$0xff] %vm44, 0.0
      %49 = vst.msk [vmem:[#allocation2 + $0x20] sm:$0xff] %vm44, 0.0
      %vm50 = vcmask 517120
      %51 = vst.msk [vmem:[#allocation2 + $0x28] sm:$0x3] %vm50, 0.0
    $region21: #{tpu_custom_call.1} parent=1 // pred_fallthru
      _
    %v52 = vld [vmem:[#allocation3] sm:$0xff]
    %v53 = vld [vmem:[#allocation3 + $0x8] sm:$0xff]
    %vm54 = vcmask 523264
    %55 = vst.msk [vmem:[#allocation2 + $0x1] sm:$0xff] %vm54, %v52
    %56 = vst.msk [vmem:[#allocation2 + $0x9] sm:$0xff] %vm54, %v53
    %s57 = scalar_lea.vmem [#allocation3], 16
    %v58 = vld [vmem:[%s57] sm:$0xff]
    %v59 = vld [vmem:[%s57 + $0x8] sm:$0xff]
    %60 = vst.msk [vmem:[#allocation2 + $0x19] sm:$0xff] %vm54, %v58
    %61 = vst.msk [vmem:[#allocation2 + $0x21] sm:$0xff] %vm54, %v59
    %v62 = vld [vmem:[#allocation2] sm:$0xff]
    %v63 = vld [vmem:[#allocation2 + $0x8] sm:$0xff]
    %v64 = vld [vmem:[#allocation2 + $0x10] sm:$0xff]
    %v65 = vld [vmem:[#allocation2 + $0x18] sm:$0xff]
    %v66 = vld [vmem:[#allocation2 + $0x20] sm:$0xff]
    %v67 = vld [vmem:[#allocation6] sm:$0xff]
    %v68 = vld [vmem:[#allocation6 + $0x8] sm:$0xff]
    %v69 = vld [vmem:[#allocation6 + $0x10] sm:$0xff]
    %v70 = vld [vmem:[#allocation6 + $0x18] sm:$0xff]
    %v71 = vld [vmem:[#allocation6 + $0x20] sm:$0xff]
    %v72 = vld [vmem:[#allocation6 + $0x28] sm:$0xff]
    %v73 = vld [vmem:[#allocation6 + $0x30] sm:$0xff]
    %v74 = vld [vmem:[#allocation6 + $0x38] sm:$0xff]
    %v75 = vld [vmem:[#allocation2 + $0x1] sm:$0xff]
    %v76 = vld [vmem:[#allocation2 + $0x9] sm:$0xff]
    %v77 = vld [vmem:[#allocation2 + $0x11] sm:$0xff]
    %v78 = vld [vmem:[#allocation2 + $0x19] sm:$0xff]
    %v79 = vld [vmem:[#allocation2 + $0x21] sm:$0xff]
    %s80 = scalar_lea.vmem [#allocation6], 64
    %v81 = vld [vmem:[%s80] sm:$0xff]
    %v82 = vld [vmem:[%s80 + $0x8] sm:$0xff]
    %v83 = vld [vmem:[%s80 + $0x10] sm:$0xff]
    %v84 = vld [vmem:[%s80 + $0x18] sm:$0xff]
    %v85 = vld [vmem:[%s80 + $0x20] sm:$0xff]
    %v86 = vld [vmem:[%s80 + $0x28] sm:$0xff]
    %v87 = vld [vmem:[%s80 + $0x30] sm:$0xff]
    %v88 = vld [vmem:[%s80 + $0x38] sm:$0xff]
    %v90 = vsel %vm54, %v75, 0
    %v93 = vsel %vm54, %v76, 0
    %v96 = vsel %vm54, %v77, 0
    %v99 = vsel %vm54, %v78, 0
    %v102 = vsel %vm54, %v79, 0
    %104 = vmatprep.subr.mxu0 0.0
    %105 = vmatpush1.msra.mxu0 0.0
    %106 = vmatprep.subr.mxu0 0.0
    %107 = vmatpush1.msra.mxu0 0.0
    %108 = vmatprep.subr.mxu0 0.0
    %109 = vmatpush1.msra.mxu0 0.0
    %110 = vmatprep.subr.mxu0 0.0
    %111 = vmatpush1.msra.mxu0 0.0
    %112 = vmatprep.subr.mxu0 0.0
    %113 = vmatpush1.msra.mxu0 0.0
    %114 = vmatprep.subr.mxu0 0.0
    %115 = vmatpush1.msra.mxu0 0.0
    %116 = vmatprep.subr.mxu0 0.0
    %117 = vmatpush1.msra.mxu0 0.0
    %118 = vmatprep.subr.mxu0 0.0
    %119 = vmatpush1.msra.mxu0 0.0
    %120 = vmatprep.subr.mxu0 0.0
    %121 = vmatpush1.msra.mxu0 %v88
    %122 = vmatprep.subr.mxu0 0.0
    %123 = vmatpush1.msra.mxu0 %v87
    %124 = vmatprep.subr.mxu0 0.0
    %125 = vmatpush1.msra.mxu0 %v86
    %126 = vmatprep.subr.mxu0 0.0
    %127 = vmatpush1.msra.mxu0 %v85
    %128 = vmatprep.subr.mxu0 0.0
    %129 = vmatpush1.msra.mxu0 %v84
    %130 = vmatprep.subr.mxu0 0.0
    %131 = vmatpush1.msra.mxu0 %v83
    %132 = vmatprep.subr.mxu0 0.0
    %133 = vmatpush1.msra.mxu0 %v82
    %134 = vmatprep.subr.mxu0 0.0
    %135 = vmatpush1.msra.mxu0 %v81
    %136 = vmatprep.subr.mxu0 0.0
    %137 = vmatpush2.msra.mxu0 0.0
    %138 = vmatprep.subr.mxu0 0.0
    %139 = vmatpush2.msra.mxu0 0.0
    %140 = vmatprep.subr.mxu0 0.0
    %141 = vmatpush2.msra.mxu0 0.0
    %142 = vmatprep.subr.mxu0 0.0
    %143 = vmatpush2.msra.mxu0 0.0
    %144 = vmatprep.subr.mxu0 0.0
    %145 = vmatpush2.msra.mxu0 0.0
    %146 = vmatprep.subr.mxu0 0.0
    %147 = vmatpush2.msra.mxu0 0.0
    %148 = vmatprep.subr.mxu0 0.0
    %149 = vmatpush2.msra.mxu0 0.0
    %150 = vmatprep.subr.mxu0 0.0
    %151 = vmatpush2.msra.mxu0 0.0
    %152 = vmatprep.subr.mxu0 0.0
    %153 = vmatpush2.msra.mxu0 0.0
    %154 = vmatprep.subr.mxu0 0.0
    %155 = vmatpush2.msra.mxu0 0.0
    %156 = vmatprep.subr.mxu0 0.0
    %157 = vmatpush2.msra.mxu0 0.0
    %158 = vmatprep.subr.mxu0 0.0
    %159 = vmatpush2.msra.mxu0 0.0
    %160 = vmatprep.subr.mxu0 0.0
    %161 = vmatpush2.msra.mxu0 0.0
    %162 = vmatprep.subr.mxu0 0.0
    %163 = vmatpush2.msra.mxu0 0.0
    %164 = vmatprep.subr.mxu0 0.0
    %165 = vmatpush2.msra.mxu0 0.0
    %166 = vmatprep.subr.mxu0 0.0
    %167 = vmatpush2.msra.mxu0 0.0
    %168 = vmatprep.mubr.f32.mxu0 0.0
    %169 = vmatmul.mubr.f32.gmra.mxu0 %v90
    %v170 = vpop.f32.mrf.mxu0
    %v171 = vadd.f32 0.0, %v170
    %v172 = vpop.f32.mrf.mxu0
    %173 = vmatprep.mubr.f32.mxu0 0.0
    %174 = vmatmul.mubr.f32.gmra.mxu0 %v93
    %v175 = vpop.f32.mrf.mxu0
    %v176 = vadd.f32 0.0, %v175
    %v177 = vpop.f32.mrf.mxu0
    %178 = vmatprep.mubr.f32.mxu0 0.0
    %179 = vmatmul.mubr.f32.gmra.mxu0 %v96
    %v180 = vpop.f32.mrf.mxu0
    %v181 = vpop.f32.mrf.mxu0
    %182 = vmatprep.mubr.f32.mxu0 0.0
    %183 = vmatmul.mubr.f32.gmra.mxu0 %v99
    %v184 = vpop.f32.mrf.mxu0
    %v185 = vadd.f32 0.0, %v184
    %v186 = vpop.f32.mrf.mxu0
    %187 = vmatprep.mubr.f32.mxu0 0.0
    %188 = vmatmul.mubr.f32.gmra.mxu0 %v102
    %v189 = vpop.f32.mrf.mxu0
    %v190 = vadd.f32 0.0, %v189
    %v191 = vpop.f32.mrf.mxu0
    %192 = vdwg.mxu0
    %v194 = vsel %vm54, %v62, 0
    %v197 = vsel %vm54, %v63, 0
    %v200 = vsel %vm54, %v64, 0
    %v203 = vsel %vm54, %v65, 0
    %v206 = vsel %vm54, %v66, 0
    %208 = vmatprep.subr.mxu0 0.0
    %209 = vmatpush1.msra.mxu0 0.0
    %210 = vmatprep.subr.mxu0 0.0
    %211 = vmatpush1.msra.mxu0 0.0
    %212 = vmatprep.subr.mxu0 0.0
    %213 = vmatpush1.msra.mxu0 0.0
    %214 = vmatprep.subr.mxu0 0.0
    %215 = vmatpush1.msra.mxu0 0.0
    %216 = vmatprep.subr.mxu0 0.0
    %217 = vmatpush1.msra.mxu0 0.0
    %218 = vmatprep.subr.mxu0 0.0
    %219 = vmatpush1.msra.mxu0 0.0
    %220 = vmatprep.subr.mxu0 0.0
    %221 = vmatpush1.msra.mxu0 0.0
    %222 = vmatprep.subr.mxu0 0.0
    %223 = vmatpush1.msra.mxu0 0.0
    %224 = vmatprep.subr.mxu0 0.0
    %225 = vmatpush1.msra.mxu0 %v74
    %226 = vmatprep.subr.mxu0 0.0
    %227 = vmatpush1.msra.mxu0 %v73
    %228 = vmatprep.subr.mxu0 0.0
    %229 = vmatpush1.msra.mxu0 %v72
    %230 = vmatprep.subr.mxu0 0.0
    %231 = vmatpush1.msra.mxu0 %v71
    %232 = vmatprep.subr.mxu0 0.0
    %233 = vmatpush1.msra.mxu0 %v70
    %234 = vmatprep.subr.mxu0 0.0
    %235 = vmatpush1.msra.mxu0 %v69
    %236 = vmatprep.subr.mxu0 0.0
    %237 = vmatpush1.msra.mxu0 %v68
    %238 = vmatprep.subr.mxu0 0.0
    %239 = vmatpush1.msra.mxu0 %v67
    %240 = vmatprep.subr.mxu0 0.0
    %241 = vmatpush2.msra.mxu0 0.0
    %242 = vmatprep.subr.mxu0 0.0
    %243 = vmatpush2.msra.mxu0 0.0
    %244 = vmatprep.subr.mxu0 0.0
    %245 = vmatpush2.msra.mxu0 0.0
    %246 = vmatprep.subr.mxu0 0.0
    %247 = vmatpush2.msra.mxu0 0.0
    %248 = vmatprep.subr.mxu0 0.0
    %249 = vmatpush2.msra.mxu0 0.0
    %250 = vmatprep.subr.mxu0 0.0
    %251 = vmatpush2.msra.mxu0 0.0
    %252 = vmatprep.subr.mxu0 0.0
    %253 = vmatpush2.msra.mxu0 0.0
    %254 = vmatprep.subr.mxu0 0.0
    %255 = vmatpush2.msra.mxu0 0.0
    %256 = vmatprep.subr.mxu0 0.0
    %257 = vmatpush2.msra.mxu0 0.0
    %258 = vmatprep.subr.mxu0 0.0
    %259 = vmatpush2.msra.mxu0 0.0
    %260 = vmatprep.subr.mxu0 0.0
    %261 = vmatpush2.msra.mxu0 0.0
    %262 = vmatprep.subr.mxu0 0.0
    %263 = vmatpush2.msra.mxu0 0.0
    %264 = vmatprep.subr.mxu0 0.0
    %265 = vmatpush2.msra.mxu0 0.0
    %266 = vmatprep.subr.mxu0 0.0
    %267 = vmatpush2.msra.mxu0 0.0
    %268 = vmatprep.subr.mxu0 0.0
    %269 = vmatpush2.msra.mxu0 0.0
    %270 = vmatprep.subr.mxu0 0.0
    %271 = vmatpush2.msra.mxu0 0.0
    %272 = vmatprep.mubr.f32.mxu0 0.0
    %273 = vmatmul.mubr.f32.gmra.mxu0 %v194
    %v274 = vpop.f32.mrf.mxu0
    %v275 = vadd.f32 %v171, %v274
    %v276 = vpop.f32.mrf.mxu0
    %277 = vmatprep.mubr.f32.mxu0 0.0
    %278 = vmatmul.mubr.f32.gmra.mxu0 %v197
    %v279 = vpop.f32.mrf.mxu0
    %v280 = vadd.f32 %v176, %v279
    %v281 = vpop.f32.mrf.mxu0
    %282 = vmatprep.mubr.f32.mxu0 0.0
    %283 = vmatmul.mubr.f32.gmra.mxu0 %v200
    %v284 = vpop.f32.mrf.mxu0
    %v285 = vpop.f32.mrf.mxu0
    %286 = vmatprep.mubr.f32.mxu0 0.0
    %287 = vmatmul.mubr.f32.gmra.mxu0 %v203
    %v288 = vpop.f32.mrf.mxu0
    %v289 = vadd.f32 %v185, %v288
    %v290 = vpop.f32.mrf.mxu0
    %291 = vmatprep.mubr.f32.mxu0 0.0
    %292 = vmatmul.mubr.f32.gmra.mxu0 %v206
    %v293 = vpop.f32.mrf.mxu0
    %v294 = vadd.f32 %v190, %v293
    %v295 = vpop.f32.mrf.mxu0
    %296 = vdwg.mxu0
    %v297 = vld [vmem:[#allocation2 + $0x2] sm:$0xff]
    %v298 = vld [vmem:[#allocation2 + $0xa] sm:$0xff]
    %v299 = vld [vmem:[#allocation2 + $0x12] sm:$0xff]
    %v300 = vld [vmem:[#allocation2 + $0x1a] sm:$0xff]
    %v301 = vld [vmem:[#allocation2 + $0x22] sm:$0xff]
    %s302 = scalar_lea.vmem [#allocation6], 128
    %v303 = vld [vmem:[%s302] sm:$0xff]
    %v304 = vld [vmem:[%s302 + $0x8] sm:$0xff]
    %v305 = vld [vmem:[%s302 + $0x10] sm:$0xff]
    %v306 = vld [vmem:[%s302 + $0x18] sm:$0xff]
    %v307 = vld [vmem:[%s302 + $0x20] sm:$0xff]
    %v308 = vld [vmem:[%s302 + $0x28] sm:$0xff]
    %v309 = vld [vmem:[%s302 + $0x30] sm:$0xff]
    %v310 = vld [vmem:[%s302 + $0x38] sm:$0xff]
    %v312 = vsel %vm54, %v297, 0
    %v315 = vsel %vm54, %v298, 0
    %v318 = vsel %vm54, %v299, 0
    %v321 = vsel %vm54, %v300, 0
    %v324 = vsel %vm54, %v301, 0
    %326 = vmatprep.subr.mxu0 0.0
    %327 = vmatpush1.msra.mxu0 0.0
    %328 = vmatprep.subr.mxu0 0.0
    %329 = vmatpush1.msra.mxu0 0.0
    %330 = vmatprep.subr.mxu0 0.0
    %331 = vmatpush1.msra.mxu0 0.0
    %332 = vmatprep.subr.mxu0 0.0
    %333 = vmatpush1.msra.mxu0 0.0
    %334 = vmatprep.subr.mxu0 0.0
    %335 = vmatpush1.msra.mxu0 0.0
    %336 = vmatprep.subr.mxu0 0.0
    %337 = vmatpush1.msra.mxu0 0.0
    %338 = vmatprep.subr.mxu0 0.0
    %339 = vmatpush1.msra.mxu0 0.0
    %340 = vmatprep.subr.mxu0 0.0
    %341 = vmatpush1.msra.mxu0 0.0
    %342 = vmatprep.subr.mxu0 0.0
    %343 = vmatpush1.msra.mxu0 %v310
    %344 = vmatprep.subr.mxu0 0.0
    %345 = vmatpush1.msra.mxu0 %v309
    %346 = vmatprep.subr.mxu0 0.0
    %347 = vmatpush1.msra.mxu0 %v308
    %348 = vmatprep.subr.mxu0 0.0
    %349 = vmatpush1.msra.mxu0 %v307
    %350 = vmatprep.subr.mxu0 0.0
    %351 = vmatpush1.msra.mxu0 %v306
    %352 = vmatprep.subr.mxu0 0.0
    %353 = vmatpush1.msra.mxu0 %v305
    %354 = vmatprep.subr.mxu0 0.0
    %355 = vmatpush1.msra.mxu0 %v304
    %356 = vmatprep.subr.mxu0 0.0
    %357 = vmatpush1.msra.mxu0 %v303
    %358 = vmatprep.subr.mxu0 0.0
    %359 = vmatpush2.msra.mxu0 0.0
    %360 = vmatprep.subr.mxu0 0.0
    %361 = vmatpush2.msra.mxu0 0.0
    %362 = vmatprep.subr.mxu0 0.0
    %363 = vmatpush2.msra.mxu0 0.0
    %364 = vmatprep.subr.mxu0 0.0
    %365 = vmatpush2.msra.mxu0 0.0
    %366 = vmatprep.subr.mxu0 0.0
    %367 = vmatpush2.msra.mxu0 0.0
    %368 = vmatprep.subr.mxu0 0.0
    %369 = vmatpush2.msra.mxu0 0.0
    %370 = vmatprep.subr.mxu0 0.0
    %371 = vmatpush2.msra.mxu0 0.0
    %372 = vmatprep.subr.mxu0 0.0
    %373 = vmatpush2.msra.mxu0 0.0
    %374 = vmatprep.subr.mxu0 0.0
    %375 = vmatpush2.msra.mxu0 0.0
    %376 = vmatprep.subr.mxu0 0.0
    %377 = vmatpush2.msra.mxu0 0.0
    %378 = vmatprep.subr.mxu0 0.0
    %379 = vmatpush2.msra.mxu0 0.0
    %380 = vmatprep.subr.mxu0 0.0
    %381 = vmatpush2.msra.mxu0 0.0
    %382 = vmatprep.subr.mxu0 0.0
    %383 = vmatpush2.msra.mxu0 0.0
    %384 = vmatprep.subr.mxu0 0.0
    %385 = vmatpush2.msra.mxu0 0.0
    %386 = vmatprep.subr.mxu0 0.0
    %387 = vmatpush2.msra.mxu0 0.0
    %388 = vmatprep.subr.mxu0 0.0
    %389 = vmatpush2.msra.mxu0 0.0
    %390 = vmatprep.mubr.f32.mxu0 0.0
    %391 = vmatmul.mubr.f32.gmra.mxu0 %v312
    %v392 = vpop.f32.mrf.mxu0
    %v393 = vadd.f32 0.0, %v392
    %v394 = vpop.f32.mrf.mxu0
    %395 = vmatprep.mubr.f32.mxu0 0.0
    %396 = vmatmul.mubr.f32.gmra.mxu0 %v315
    %v397 = vpop.f32.mrf.mxu0
    %v398 = vadd.f32 0.0, %v397
    %v399 = vpop.f32.mrf.mxu0
    %400 = vmatprep.mubr.f32.mxu0 0.0
    %401 = vmatmul.mubr.f32.gmra.mxu0 %v318
    %v402 = vpop.f32.mrf.mxu0
    %v403 = vpop.f32.mrf.mxu0
    %404 = vmatprep.mubr.f32.mxu0 0.0
    %405 = vmatmul.mubr.f32.gmra.mxu0 %v321
    %v406 = vpop.f32.mrf.mxu0
    %v407 = vadd.f32 0.0, %v406
    %v408 = vpop.f32.mrf.mxu0
    %409 = vmatprep.mubr.f32.mxu0 0.0
    %410 = vmatmul.mubr.f32.gmra.mxu0 %v324
    %v411 = vpop.f32.mrf.mxu0
    %v412 = vadd.f32 0.0, %v411
    %v413 = vpop.f32.mrf.mxu0
    %414 = vdwg.mxu0
    %v415 = vadd.f32 %v275, %v393
    %v416 = vadd.f32 %v280, %v398
    %v417 = vadd.f32 %v289, %v407
    %v418 = vadd.f32 %v294, %v412
    %v419 = vadd.f32 %v415, %v416
    %v420 = vrot.slane %v419, 4
    %v421 = vadd.f32 %v419, %v420
    %v422 = vrot.slane %v421, 2
    %v423 = vadd.f32 %v421, %v422
    %v424 = vrot.slane %v423, 1
    %v425 = vadd.f32 %v423, %v424
    %426 = vrot.lane.b32.xlu0 %v425, 8
    %v427 = vpop.permute.xlu0 %426
    %v428 = vadd.f32 %v425, %v427
    %429 = vrot.lane.b32.xlu0 %v428, 16
    %v430 = vpop.permute.xlu0 %429
    %v431 = vadd.f32 %v428, %v430
    %432 = vrot.lane.b32.xlu0 %v431, 32
    %v433 = vpop.permute.xlu0 %432
    %v434 = vadd.f32 %v431, %v433
    %435 = vrot.lane.b32.xlu0 %v434, 64
    %v436 = vpop.permute.xlu0 %435
    %v437 = vadd.f32 %v434, %v436
    %v438 = vmul.f32 %v415, %v415
    %v439 = vmul.f32 %v416, %v416
    %v440 = vadd.f32 %v438, %v439
    %v441 = vrot.slane %v440, 4
    %v442 = vadd.f32 %v440, %v441
    %v443 = vrot.slane %v442, 2
    %v444 = vadd.f32 %v442, %v443
    %v445 = vrot.slane %v444, 1
    %v446 = vadd.f32 %v444, %v445
    %447 = vrot.lane.b32.xlu0 %v446, 8
    %v448 = vpop.permute.xlu0 %447
    %v449 = vadd.f32 %v446, %v448
    %450 = vrot.lane.b32.xlu0 %v449, 16
    %v451 = vpop.permute.xlu0 %450
    %v452 = vadd.f32 %v449, %v451
    %453 = vrot.lane.b32.xlu0 %v452, 32
    %v454 = vpop.permute.xlu0 %453
    %v455 = vadd.f32 %v452, %v454
    %456 = vrot.lane.b32.xlu0 %v455, 64
    %v457 = vpop.permute.xlu0 %456
    %v458 = vadd.f32 %v455, %v457
    %v459 = vmul.f32 %v437, 0.00390625
    %v460 = vmul.f32 %v458, 0.00390625
    %v461 = vmul.f32 %v459, %v459
    %v462 = vsub.f32 %v460, %v461
    %v463 = vlaneseq
    %v464 = vshrl.u32 %v463, 7
    %v465 = vsub.s32 0, %v464
    %v466 = vrot.slane %v459, %v465
    %v467 = vsub.f32 %v415, %v466
    %v468 = vsub.f32 %v416, %v466
    %v469 = vadd.f32 %v462, 1e-05
    %v470 = vrsqrt.pop %v469
    %v471 = vlaneseq
    %v472 = vshrl.u32 %v471, 7
    %v473 = vsub.s32 0, %v472
    %v474 = vrot.slane %v470, %v473
    %v475 = vmul.f32 %v467, %v474
    %v476 = vmul.f32 %v468, %v474
    %v477 = vmax.f32 %v475, 0.0
    %v478 = vmax.f32 %v476, 0.0
    %479 = vst [vmem:[#allocation8] sm:$0xff] %v477
    %480 = vst [vmem:[#allocation8 + $0x8] sm:$0xff] %v478
    %v481 = vadd.f32 %v417, %v418
    %v482 = vrot.slane %v481, 4
    %v483 = vadd.f32 %v481, %v482
    %v484 = vrot.slane %v483, 2
    %v485 = vadd.f32 %v483, %v484
    %v486 = vrot.slane %v485, 1
    %v487 = vadd.f32 %v485, %v486
    %488 = vrot.lane.b32.xlu0 %v487, 8
    %v489 = vpop.permute.xlu0 %488
    %v490 = vadd.f32 %v487, %v489
    %491 = vrot.lane.b32.xlu0 %v490, 16
    %v492 = vpop.permute.xlu0 %491
    %v493 = vadd.f32 %v490, %v492
    %494 = vrot.lane.b32.xlu0 %v493, 32
    %v495 = vpop.permute.xlu0 %494
    %v496 = vadd.f32 %v493, %v495
    %497 = vrot.lane.b32.xlu0 %v496, 64
    %v498 = vpop.permute.xlu0 %497
    %v499 = vadd.f32 %v496, %v498
    %v500 = vmul.f32 %v417, %v417
    %v501 = vmul.f32 %v418, %v418
    %v502 = vadd.f32 %v500, %v501
    %v503 = vrot.slane %v502, 4
    %v504 = vadd.f32 %v502, %v503
    %v505 = vrot.slane %v504, 2
    %v506 = vadd.f32 %v504, %v505
    %v507 = vrot.slane %v506, 1
    %v508 = vadd.f32 %v506, %v507
    %509 = vrot.lane.b32.xlu0 %v508, 8
    %v510 = vpop.permute.xlu0 %509
    %v511 = vadd.f32 %v508, %v510
    %512 = vrot.lane.b32.xlu0 %v511, 16
    %v513 = vpop.permute.xlu0 %512
    %v514 = vadd.f32 %v511, %v513
    %515 = vrot.lane.b32.xlu0 %v514, 32
    %v516 = vpop.permute.xlu0 %515
    %v517 = vadd.f32 %v514, %v516
    %518 = vrot.lane.b32.xlu0 %v517, 64
    %v519 = vpop.permute.xlu0 %518
    %v520 = vadd.f32 %v517, %v519
    %v521 = vmul.f32 %v499, 0.00390625
    %v522 = vmul.f32 %v520, 0.00390625
    %v523 = vmul.f32 %v521, %v521
    %v524 = vsub.f32 %v522, %v523
    %v525 = vlaneseq
    %v526 = vshrl.u32 %v525, 7
    %v527 = vsub.s32 0, %v526
    %v528 = vrot.slane %v521, %v527
    %v529 = vsub.f32 %v417, %v528
    %v530 = vsub.f32 %v418, %v528
    %v531 = vadd.f32 %v524, 1e-05
    %v532 = vrsqrt.pop %v531
    %v533 = vlaneseq
    %v534 = vshrl.u32 %v533, 7
    %v535 = vsub.s32 0, %v534
    %v536 = vrot.slane %v532, %v535
    %v537 = vmul.f32 %v529, %v536
    %v538 = vmul.f32 %v530, %v536
    %v539 = vmax.f32 %v537, 0.0
    %v540 = vmax.f32 %v538, 0.0
    %s541 = scalar_lea.vmem [#allocation8], 16
    %542 = vst [vmem:[%s541] sm:$0xff] %v539
    %543 = vst [vmem:[%s541 + $0x8] sm:$0xff] %v540
    // Predicated region
    $region22: #{tpu_custom_call.1} parent=1 // pred_check
      _
    $region23: #{tpu_custom_call.1} parent=1 // pred_check_branch
      %545 = sbr.rel (0) target = $region25
    $region24: #{tpu_custom_call.1} parent=1 // pred_region
      %s547 = ssub.s32 512, 512
      %548 = vsyncadd [#allocation5], %s547
      %s549 = sshll.u32 [#allocation8], 4
      %s550 = int_to_ptr.vmem [resolvable:$true] %s549
      %555 = dma.vmem_to_hbm [thread:$0]  %s550, 512, %s2, [#allocation5], 128, 128, 8
    $region25: #{tpu_custom_call.1} parent=1 // pred_fallthru
      _
    // Predicated region
    $region26: #{tpu_custom_call.1} parent=1 // pred_check
      _
    $region27: #{tpu_custom_call.1} parent=1 // pred_check_branch
      %557 = sbr.rel (0) target = $region29
    $region28: #{tpu_custom_call.1} parent=1 // pred_region
      %558 = dma.done [#allocation5], 512
    $region29: #{tpu_custom_call.1} parent=1 // pred_fallthru
      _
    %559 = vsyncpa [#allocation4], 1
    %560 = vsyncpa [#allocation7], 1
    %561 = vsyncpa [#allocation5], 1

</llo_original>
